<compile_context>
chip_gen: v7x
topology: tpu7x:2x2x1
jax: 0.10.0
libtpu: 0.0.40
codegen_flags: <defaults>
</compile_context>

<pallas_src>
import functools

import jax
import jax.numpy as jnp
from jax import lax
from jax.experimental import pallas as pl
from jax.experimental.pallas import tpu as pltpu


def _round_up(v, m):
    return ((v + m - 1) // m) * m


def _detect_roll_direction():
    """True if pltpu.roll matches jnp.roll (out[i] = x[(i - shift) % n]).

    Tiny one-off probe so the in-kernel shifted windows are correct regardless
    of the rotate sign convention on the installed jax/Mosaic version.
    """
    def kernel(x_ref, o_ref):
        o_ref[...] = pltpu.roll(x_ref[...], 1, 1)

    x = jnp.tile(jnp.arange(128, dtype=jnp.float32)[None, :], (8, 1))
    out = pl.pallas_call(
        kernel, out_shape=jax.ShapeDtypeStruct((8, 128), jnp.float32))(x)
    v = float(jax.device_get(out)[0, 0])
    if v == 127.0:
        return True
    if v == 1.0:
        return False
    raise RuntimeError(f"unexpected pltpu.roll semantics (probe value {v})")


def _build_ode_kernel(N, Cp, Fp, H, W, L, n_steps, roll_like_jnp):
    """pallas_call that integrates the conv ODE from t=0 to t=1 for N images."""
    Wp = W + 2
    # Tap offsets in the flattened padded plane for a 3x3 kernel with pad 1.
    taps = [(ky - 1) * Wp + (kx - 1) for ky in range(3) for kx in range(3)]
    dt = 1.0 / n_steps

    def shift_amt(d):
        # We want rolled[q] = z[(q + d) % L]  (exact for all interior pixels).
        return (-d) % L if roll_like_jnp else d % L

    def kernel(x_ref, w1_ref, b1_ref, tm1_ref, w2_ref, b2_ref, tm2_ref,
               mask_ref, out_ref):
        mask = mask_ref[...]                                    # (1, L)

        def conv(z, w_ref, b_ref, tm_ref, t):
            # im2col via lane rotations: patches[tap*Cin + c, q] = z[c, q + d_tap]
            wins = [z if d == 0 else pltpu.roll(z, shift_amt(d), 1)
                    for d in taps]
            patches = jnp.concatenate(wins, axis=0)             # (9*Cin, L)
            o = jnp.dot(w_ref[...], patches,
                        preferred_element_type=jnp.float32)     # (Cout, L)
            # + bias + folded time channel, then zero the padding ring / tail
            # (the zero ring is the next conv's implicit zero padding).
            return mask * (o + b_ref[...] + t * tm_ref[...])

        def odefunc(y, t):
            h = conv(y, w1_ref, b1_ref, tm1_ref, t)             # (Fp, L)
            return conv(h, w2_ref, b2_ref, tm2_ref, t)          # (Cp, L)

        def rk4_step(i, y):
            t0 = i.astype(jnp.float32) * dt
            k = odefunc(y, t0)                                  # k1
            acc = k
            k = odefunc(y + (0.5 * dt) * k, t0 + 0.5 * dt)      # k2
            acc = acc + 2.0 * k
            k = odefunc(y + (0.5 * dt) * k, t0 + 0.5 * dt)      # k3
            acc = acc + 2.0 * k
            k = odefunc(y + dt * k, t0 + dt)                    # k4
            acc = acc + k
            return y + (dt / 6.0) * acc

        out_ref[0] = lax.fori_loop(0, n_steps, rk4_step, x_ref[0])

    return pl.pallas_call(
        kernel,
        out_shape=jax.ShapeDtypeStruct((N, Cp, L), jnp.float32),
        grid_spec=pltpu.PrefetchScalarGridSpec(
            num_scalar_prefetch=0,
            grid=(N,),
            in_specs=[
                pl.BlockSpec((1, Cp, L), lambda n: (n, 0, 0)),   # y0 (padded-flat)
                pl.BlockSpec((Fp, 9 * Cp), lambda n: (0, 0)),    # conv1 weights
                pl.BlockSpec((Fp, 1), lambda n: (0, 0)),         # conv1 bias
                pl.BlockSpec((Fp, L), lambda n: (0, 0)),         # conv1 time map
                pl.BlockSpec((Cp, 9 * Fp), lambda n: (0, 0)),    # conv2 weights
                pl.BlockSpec((Cp, 1), lambda n: (0, 0)),         # conv2 bias
                pl.BlockSpec((Cp, L), lambda n: (0, 0)),         # conv2 time map
                pl.BlockSpec((1, L), lambda n: (0, 0)),          # interior mask
            ],
            out_specs=pl.BlockSpec((1, Cp, L), lambda n: (n, 0, 0)),
        ),
        compiler_params=pltpu.CompilerParams(
            dimension_semantics=("parallel",)),
    )


def init_params(key, C, F):
    """PyTorch-layout parameters (deterministic, synthetic)."""
    k1, k2, k3, k4 = jax.random.split(key, 4)
    # Conv2dTime adds one input channel (the time channel, at index 0).
    w1 = jax.random.normal(k1, (F, C + 1, 3, 3), jnp.float32) * 0.1  # conv1.weight
    b1 = jax.random.normal(k2, (F,), jnp.float32) * 0.1              # conv1.bias
    w2 = jax.random.normal(k3, (C, F + 1, 3, 3), jnp.float32) * 0.1  # conv2.weight
    b2 = jax.random.normal(k4, (C,), jnp.float32) * 0.1              # conv2.bias
    return w1, b1, w2, b2


def _pack_params(raw, H, W, L, Cp, Fp):
    """Repack torch-layout weights for the lane-dense padded-flat kernel."""
    w1, b1, w2, b2 = raw
    F = w1.shape[0]
    C = w2.shape[0]
    P = (H + 2) * (W + 2)

    def x_weight(w, coutp, cinp):
        # (Cout, Cin(+time at idx 0), 3, 3) -> (Coutp, 9*Cinp), tap-major cols.
        cout, cin = w.shape[0], w.shape[1] - 1
        wx = jnp.transpose(w[:, 1:], (0, 2, 3, 1))                  # (Cout,3,3,Cin)
        wx = jnp.pad(wx, ((0, coutp - cout), (0, 0), (0, 0), (0, cinp - cin)))
        return wx.reshape(coutp, 9 * cinp)

    def time_map(w, coutp):
        # Time channel = constant-t image, zero-padded by the conv.  Its
        # contribution is t * conv(ones_padded, w_time); that map is
        # t-independent and is laid out padded-flat with a zero ring/tail.
        wt = w[:, 0]                                                # (Cout,3,3)
        cout = wt.shape[0]
        ones_pad = jnp.pad(jnp.ones((H, W), jnp.float32), 1)
        acc = jnp.zeros((cout, H, W), jnp.float32)
        for ky in range(3):
            for kx in range(3):
                acc = acc + (wt[:, ky, kx][:, None, None]
                             * ones_pad[ky:ky + H, kx:kx + W][None])
        full = jnp.zeros((cout, H + 2, W + 2), jnp.float32)
        full = full.at[:, 1:H + 1, 1:W + 1].set(acc)
        flat = full.reshape(cout, P)
        return jnp.pad(flat, ((0, coutp - cout), (0, L - P)))

    mask = jnp.zeros((H + 2, W + 2), jnp.float32)
    mask = mask.at[1:H + 1, 1:W + 1].set(1.0).reshape(1, P)
    mask = jnp.pad(mask, ((0, 0), (0, L - P)))

    return (x_weight(w1, Fp, Cp), jnp.pad(b1, (0, Fp - F)).reshape(Fp, 1),
            time_map(w1, Fp),
            x_weight(w2, Cp, Fp), jnp.pad(b2, (0, Cp - C)).reshape(Cp, 1),
            time_map(w2, Cp),
            mask)


def conv_odenet_forward(x_nchw, raw_params, *, num_filters, augment_dim=0,
                        n_steps=8, roll_like_jnp=True):
    """ConvODENet.forward: integrate the conv ODE from t=0 to t=1 (NCHW)."""
    # TODO(synk): PyTorch's ODEBlock uses adaptive dopri5 (torchdiffeq) with
    # rtol=atol=tol; here we integrate with fixed-step RK4 inside the kernel,
    # matching semantics up to ODE-solver tolerance.
    x = x_nchw.astype(jnp.float32)
    N, Cin, H, W = x.shape
    if augment_dim > 0:
        x = jnp.concatenate(
            [x, jnp.zeros((N, augment_dim, H, W), x.dtype)], axis=1)
    C = Cin + augment_dim
    F = num_filters
    Cp, Fp = _round_up(C, 8), _round_up(F, 8)
    P = (H + 2) * (W + 2)
    L = _round_up(P, 128)

    packed = _pack_params(raw_params, H, W, L, Cp, Fp)

    # One-time layout plumbing per forward (NOT per odefunc eval): zero-pad the
    # channel dim to a sublane multiple, add the 1-pixel halo, and flatten the
    # padded plane onto the lane axis (length rounded up to 128).
    xp = jnp.pad(x, ((0, 0), (0, Cp - C), (1, 1), (1, 1))).reshape(N, Cp, P)
    xp = jnp.pad(xp, ((0, 0), (0, 0), (0, L - P)))

    call = _build_ode_kernel(N, Cp, Fp, H, W, L, n_steps, roll_like_jnp)
    yT = call(xp, *packed)

    yT = yT[:, :C, :P].reshape(N, C, H + 2, W + 2)[:, :, 1:H + 1, 1:W + 1]
    return yT


# ---------------------------- pure-JAX reference ----------------------------

def _ref_odefunc(t, x, w1, b1, w2, b2):
    """One ConvODEFunc evaluation (NCHW, torch-layout weights)."""
    def conv(z, w, b):
        o = lax.conv_general_dilated(
            z, w, window_strides=(1, 1), padding="SAME",
            dimension_numbers=("NCHW", "OIHW", "NCHW"))
        return o + b[None, :, None, None]

    N, _, H, W = x.shape
    t_img = jnp.full((N, 1, H, W), t, jnp.float32)
    h = conv(jnp.concatenate([t_img, x], axis=1), w1, b1)
    return conv(jnp.concatenate([t_img, h], axis=1), w2, b2)


def ref_forward(x, raw_params, n_steps=8):
    dt = 1.0 / n_steps

    def step(i, y):
        t = i.astype(jnp.float32) * dt
        k1 = _ref_odefunc(t, y, *raw_params)
        k2 = _ref_odefunc(t + dt / 2, y + (dt / 2) * k1, *raw_params)
        k3 = _ref_odefunc(t + dt / 2, y + (dt / 2) * k2, *raw_params)
        k4 = _ref_odefunc(t + dt, y + dt * k3, *raw_params)
        return y + (dt / 6.0) * (k1 + 2 * k2 + 2 * k3 + k4)

    return lax.fori_loop(0, n_steps, step, x.astype(jnp.float32))


if __name__ == "__main__":
    key = jax.random.PRNGKey(0)
    kx, kp = jax.random.split(key)

    N, Cin, H, W = 2, 4, 16, 16
    num_filters = 8
    augment_dim = 0
    n_steps = 8

    x = jax.random.normal(kx, (N, Cin, H, W), jnp.float32)
    raw = init_params(kp, Cin + augment_dim, num_filters)

    # Resolve the hardware rotate direction once (tiny probe kernel).
    roll_like_jnp = _detect_roll_direction()

    fwd = jax.jit(functools.partial(conv_odenet_forward,
                                    num_filters=num_filters,
                                    augment_dim=augment_dim,
                                    n_steps=n_steps,
                                    roll_like_jnp=roll_like_jnp))
    out = jax.block_until_ready(fwd(x, raw))

    ref = jax.block_until_ready(
        jax.jit(functools.partial(ref_forward, n_steps=n_steps))(x, raw))

    assert out.shape == (N, Cin + augment_dim, H, W)
    assert bool(jnp.all(jnp.isfinite(out)))
    err = float(jnp.max(jnp.abs(out - ref)))
    assert jnp.allclose(out, ref, atol=2e-3, rtol=2e-3), f"max abs err {err}"
    print("KERNEL_OK")
</pallas_src>

<mosaic_0001>
module attributes {stable_mosaic.version = 11 : i64} {
  func.func @kernel(%arg0: memref<8x128xf32, #tpu.memory_space<vmem>>, %arg1: memref<8x128xf32, #tpu.memory_space<vmem>>) attributes {dimension_semantics = [], scalar_prefetch = 0 : i64, scratch_operands = 0 : i64, tpu.core_type = #tpu.core_type<tc>} {
    %c0 = arith.constant 0 : index
    %c0_0 = arith.constant 0 : index
    %0 = vector.load %arg0[%c0, %c0_0] : memref<8x128xf32, #tpu.memory_space<vmem>>, vector<8x128xf32>
    %c1_i32 = arith.constant 1 : i32
    %1 = tpu.dynamic_rotate %0 by %c1_i32 dim 1 : vector<8x128xf32>, i32 -> vector<8x128xf32>
    %c0_1 = arith.constant 0 : index
    %c0_2 = arith.constant 0 : index
    %2 = vector.load %arg1[%c0_1, %c0_2] : memref<8x128xf32, #tpu.memory_space<vmem>>, vector<8x128xf32>
    tpu.vector_store %arg1[%c0_1, %c0_2], %1 {strides = array<i32>} : memref<8x128xf32, #tpu.memory_space<vmem>>, vector<8x128xf32>,
    return
  }
}

</mosaic_0001>

<llo_original>
// kernel: tpu_custom_call.1
$region0: #{tpu_custom_call.1}
  #allocation0 [shape = 'u32[]', space=smem, size = 0x4, offset = 0x4, fixed_abs, tag = 'smem constant byte address 0x4 - core index']
  #allocation1 [shape = 'u32[144,128]{1,0:T(1,128)}', space=vmem, size = 0x12000, scoped, tag = 'internal scratch']
  %s0 = inlined_call_operand.hbm [shape: f32[8,128], index: 0, kind: input, shape index: {}]
  %s1 = inlined_call_operand.hbm [shape: f32[8,128], index: 1, kind: output, shape index: {}]
  %s2 = sld [smem:[#allocation0]]
  $region18: #{tpu_custom_call.1} parent=0
    _
  %s4 = ssub.s32 1, %s2
  %s5 = scalar_select 0, %s4, %s2
  $region1: #{tpu_custom_call.1} parent=0
    #allocation2 [shape = 'u8[4096]{0}', space=vmem, size = 0x1000, scoped, tag = 'input window, operand 0, single buffered']
    #allocation3 [shape = 's32[1]{0}', space=sflag, size = 0x4, scoped, tag = 'scoped memory for tpu_custom_call.1']
    #allocation4 [shape = 's32[1]{0}', space=sflag, size = 0x4, scoped, tag = 'scoped memory for tpu_custom_call.1']
    #allocation5 [shape = 'u8[4096]{0}', space=vmem, size = 0x1000, scoped, tag = 'output window, operand 0, single buffered']
    %6 = vsyncpa [#allocation3], 0
    %7 = vsyncpa [#allocation4], 0
    // Predicated region
    $region2: #{tpu_custom_call.1} parent=1 // pred_check
      _
    $region3: #{tpu_custom_call.1} parent=1 // pred_check_branch
      %9 = sbr.rel (0) target = $region5
    $region4: #{tpu_custom_call.1} parent=1 // pred_region
      %s11 = ssub.s32 128, 128
      %12 = vsyncadd [#allocation3], %s11
      %s14 = sshll.u32 [#allocation2], 4
      %s15 = int_to_ptr.vmem [resolvable:$true] %s14
      %17 = dma.hbm_to_vmem [thread:$0]  %s0, 128, %s15, [#allocation3]
    $region5: #{tpu_custom_call.1} parent=1 // pred_fallthru
      _
    // Predicated region
    $region6: #{tpu_custom_call.1} parent=1 // pred_check
      _
    $region7: #{tpu_custom_call.1} parent=1 // pred_check_branch
      %19 = sbr.rel (0) target = $region9
    $region8: #{tpu_custom_call.1} parent=1 // pred_region
      %20 = dma.done [#allocation3], 128
    $region9: #{tpu_custom_call.1} parent=1 // pred_fallthru
      _
    %v21 = vld [vmem:[#allocation2] sm:$0xff]
    %22 = vrot.lane.b32.xlu0 %v21, 1
    %v23 = vpop.permute.xlu0 %22
    %24 = vst [vmem:[#allocation5] sm:$0xff] %v23
    // Predicated region
    $region10: #{tpu_custom_call.1} parent=1 // pred_check
      _
    $region11: #{tpu_custom_call.1} parent=1 // pred_check_branch
      %26 = sbr.rel (0) target = $region13
    $region12: #{tpu_custom_call.1} parent=1 // pred_region
      %s28 = ssub.s32 128, 128
      %29 = vsyncadd [#allocation4], %s28
      %s31 = sshll.u32 [#allocation5], 4
      %s32 = int_to_ptr.vmem [resolvable:$true] %s31
      %34 = dma.vmem_to_hbm [thread:$0]  %s32, 128, %s1, [#allocation4]
    $region13: #{tpu_custom_call.1} parent=1 // pred_fallthru
      _
    // Predicated region
    $region14: #{tpu_custom_call.1} parent=1 // pred_check
      _
    $region15: #{tpu_custom_call.1} parent=1 // pred_check_branch
      %36 = sbr.rel (0) target = $region17
    $region16: #{tpu_custom_call.1} parent=1 // pred_region
      %37 = dma.done [#allocation4], 128
    $region17: #{tpu_custom_call.1} parent=1 // pred_fallthru
      _
    %38 = vsyncpa [#allocation3], 1
    %39 = vsyncpa [#allocation4], 1

</llo_original>
